<compile_context>
chip_gen: v7x
topology: tpu7x:2x2x1
jax: 0.10.0
libtpu: 0.0.40
codegen_flags: <defaults>
</compile_context>

<pallas_src>
import math

import jax
import jax.numpy as jnp
from jax.experimental import pallas as pl
from jax.experimental.pallas import tpu as pltpu


# ----------------------------------------------------------------------------
# Parameter / buffer setup (plain-JAX glue, mirrors AbstractPositionalEncoding)
# ----------------------------------------------------------------------------
def create_pe_array(encoding_dimension, base_period, initial_period, max_len):
    """pe of shape (max_len, encoding_dimension), float32.

    pe[:, 2i]   = sin(2*pi * p / (initial_period * base_period**i))
    pe[:, 2i+1] = cos(2*pi * p / (initial_period * base_period**i))
    """
    position = jnp.arange(max_len, dtype=jnp.float32)[:, None]          # (L, 1)
    even_idx = jnp.arange(0, encoding_dimension, 2, dtype=jnp.float32)
    odd_idx = jnp.arange(1, encoding_dimension, 2, dtype=jnp.float32)
    period_even = initial_period * jnp.power(jnp.float32(base_period), even_idx / 2.0)
    period_odd = initial_period * jnp.power(jnp.float32(base_period), (odd_idx - 1.0) / 2.0)
    pe = jnp.zeros((max_len, encoding_dimension), dtype=jnp.float32)
    pe = pe.at[:, 0::2].set(jnp.sin(2.0 * jnp.pi * position / period_even))
    pe = pe.at[:, 1::2].set(jnp.cos(2.0 * jnp.pi * position / period_odd))
    return pe


def make_classic_pe(d_model, base_period=None, max_len=5000):
    if base_period is None:
        base_period = math.pow(10000.0, 2.0 / d_model)
        initial_period = 2.0 * math.pi
    else:
        initial_period = base_period
    return create_pe_array(
        encoding_dimension=d_model,
        base_period=base_period,
        initial_period=initial_period,
        max_len=max_len,
    )


# ----------------------------------------------------------------------------
# Tiling heuristics
# ----------------------------------------------------------------------------
_LANE = 128
_SUBLANE = 8
_LANE_CAP = 4096            # max flattened row width (16 KiB per f32 row)
_FALLBACK_W = 1024          # row width for the padded fallback path
_TINY_ELEMS = 64 * 1024     # below this, one grid step handles everything
_VMEM_LIMIT_BYTES = 48 * 1024 * 1024   # < v7x's 64 MiB physical per-TC VMEM


def _block_bytes_for_device():
    """Generation-aware x-block byte budget.  Pure HBM-streaming kernel:
    bigger tiles amortize the ~0.35 us per-grid-step overhead on high-BW
    chips, while 2 MiB already sits at the roofline on v5e."""
    try:
        kind = jax.devices()[0].device_kind.lower()
    except Exception:
        return 4 * 1024 * 1024
    if "v5e" in kind or "v5 lite" in kind or "v5lite" in kind:
        return 2 * 1024 * 1024      # ~0.8 TB/s: already ~roofline at 2 MiB
    if "v6" in kind or "v5p" in kind:
        return 6 * 1024 * 1024      # high BW, 128 MiB VMEM
    if "v7" in kind or "7x" in kind:
        return 4 * 1024 * 1024      # ~3.2 TB/s but only 64 MiB VMEM per TC
    return 4 * 1024 * 1024


def _choose_lane_width(total):
    """Largest multiple-of-128 divisor of `total` that is <= _LANE_CAP,
    preferring one whose row count is a multiple of 8 (clean sublane tiles).
    Returns None when no multiple-of-128 divisor exists (padded path)."""
    if total % _LANE != 0:
        return None
    cap = min(total, _LANE_CAP)
    best = None
    for w in range(cap - cap % _LANE, _LANE - 1, -_LANE):
        if total % w:
            continue
        if best is None:
            best = w
        if (total // w) % _SUBLANE == 0:
            return w
    return best


def _choose_row_tile(rows, width, x_itemsize, block_bytes):
    """Rows per block: a multiple of 8 sized so the x block is ~block_bytes.
    Real per-step VMEM footprint is ~6x the x block (2 bufs x + 2 bufs out +
    2 bufs pe, all in the activation dtype), which stays below
    _VMEM_LIMIT_BYTES for every generation budget above."""
    if rows < _SUBLANE:
        return rows                                   # block == full row extent
    tr = max(_SUBLANE,
             (block_bytes // (width * x_itemsize)) // _SUBLANE * _SUBLANE)
    return min(tr, (rows // _SUBLANE) * _SUBLANE)


# ----------------------------------------------------------------------------
# Kernels
# ----------------------------------------------------------------------------
def _add_pe_kernel(x_ref, pe_ref, o_ref):
    # (TR, W) tiles; batch dim squeezed.  pe is pre-cast to x.dtype, so this is
    # a single VPU add with no pack/unpack round trip.
    o_ref[...] = (x_ref[...] + pe_ref[...]).astype(o_ref.dtype)


def _add_pe_tiny_kernel(x_ref, pe_ref, o_ref):
    # Whole-problem single block: x (B, S, D) + pe (S, D) broadcast over batch.
    o_ref[...] = (x_ref[...] + pe_ref[...][None]).astype(o_ref.dtype)


def _run_blocked(x3, pe_r, R, W, TR, cost, donate_x):
    B = x3.shape[0]
    num_t = pl.cdiv(R, TR)
    extra = {"input_output_aliases": {0: 0}} if donate_x else {}
    return pl.pallas_call(
        _add_pe_kernel,
        out_shape=jax.ShapeDtypeStruct((B, R, W), x3.dtype),
        # Row-tile axis outer, batch inner: pe's block index is constant across
        # consecutive (inner) batch steps, so pe stays resident in VMEM and is
        # only re-fetched num_t times total.  (Putting B first would re-DMA pe
        # every step and roughly double HBM reads - worse than any megacore
        # scheduling gain.)
        grid=(num_t, B),
        in_specs=[
            pl.BlockSpec((None, TR, W), lambda t, b: (b, t, 0)),   # x (batch squeezed)
            pl.BlockSpec((TR, W), lambda t, b: (t, 0)),            # pe (batch-invariant)
        ],
        out_specs=pl.BlockSpec((None, TR, W), lambda t, b: (b, t, 0)),
        compiler_params=pltpu.CompilerParams(
            dimension_semantics=("parallel", "parallel"),
            vmem_limit_bytes=_VMEM_LIMIT_BYTES,
        ),
        cost_estimate=cost,
        **extra,
    )(x3, pe_r)


# ----------------------------------------------------------------------------
# Forward
# ----------------------------------------------------------------------------
def classic_positional_encoding_forward(x, pe, *, donate_x=False):
    """out[b, s, :] = x[b, s, :] + pe[s, :]  (dropout identity in eval mode).

    x: (B, S, D); pe: (max_len, D).  Returns (B, S, D) in x.dtype.
    donate_x=True aliases the x buffer to the output (for callers that donate
    x), lowering peak HBM footprint.
    """
    B, S, D = x.shape
    max_len, d_pe = pe.shape
    if d_pe != D:
        raise ValueError(f"pe d_model {d_pe} does not match input d_model {D}")
    if S > max_len:
        raise ValueError(f"seq_len {S} exceeds positional-encoding max_len {max_len}")

    # Pre-cast pe to the activation dtype once (halves pe HBM traffic and VMEM
    # for bf16 activations; removes the in-kernel f32<->bf16 round trip).
    if pe.dtype != x.dtype:
        pe = pe.astype(x.dtype)
    x_item = x.dtype.itemsize
    total = S * D

    # Advisory hint: bandwidth-bound broadcast-add (lets XLA overlap neighbors).
    cost = pl.CostEstimate(
        flops=B * total,
        transcendentals=0,
        bytes_accessed=2 * B * total * x_item + total * x_item,
    )

    # ---- Tiny path: one grid step over the whole problem -------------------
    if B * total <= _TINY_ELEMS:
        extra = {"input_output_aliases": {0: 0}} if donate_x else {}
        return pl.pallas_call(
            _add_pe_tiny_kernel,
            out_shape=jax.ShapeDtypeStruct((B, S, D), x.dtype),
            cost_estimate=cost,
            **extra,
        )(x, pe[:S])

    block_bytes = _block_bytes_for_device()

    # ---- Fast path: D is already lane-aligned -> block (B, S, D) directly --
    if D % _LANE == 0:
        TR = _choose_row_tile(S, D, x_item, block_bytes)
        # Slice pe to exactly S rows whenever the row grid is ragged so x and
        # pe edge blocks stay row-consistent; otherwise pass pe untouched.
        exact = (TR % _SUBLANE != 0) or (S % TR != 0)
        pe_r = pe[:S] if exact else pe
        return _run_blocked(x, pe_r, S, D, TR, cost, donate_x)

    # ---- General path: flatten each (S, D) slab into lane-dense rows -------
    W = _choose_lane_width(total)
    if W is not None:
        R, padded = total // W, 0
    else:
        # No multiple-of-128 divisor of S*D: pad the flattened slab to whole
        # lane-dense rows instead of emitting an oversized / masked block.
        # TODO(synk): the pad/unpad costs one extra HBM round trip of x; only
        # taken for awkward S*D with no 128-aligned factorization.
        W = _FALLBACK_W
        R = -(-total // W)
        padded = R * W - total
    TR = _choose_row_tile(R, W, x_item, block_bytes)

    if padded == 0:
        x3 = x.reshape(B, R, W)                                    # free reshape
        exact = (TR % _SUBLANE != 0) or (R % TR != 0) or ((max_len * D) % W != 0)
        if exact:
            pe_r = pe.reshape(-1)[:total].reshape(R, W)            # tiny prefix copy
        else:
            pe_r = pe.reshape((max_len * D) // W, W)               # free reshape
    else:
        x3 = jnp.pad(x.reshape(B, total), ((0, 0), (0, padded))).reshape(B, R, W)
        pe_r = jnp.pad(pe.reshape(-1)[:total], (0, padded)).reshape(R, W)

    out = _run_blocked(x3, pe_r, R, W, TR, cost, donate_x)
    if padded:
        out = out.reshape(B, R * W)[:, :total]
    return out.reshape(B, S, D)


# ----------------------------------------------------------------------------
# Demo / correctness check
# ----------------------------------------------------------------------------
def _check(key, batch, seq_len, d_model, max_len):
    x = jax.random.normal(key, (batch, seq_len, d_model), dtype=jnp.float32)
    pe = make_classic_pe(d_model=d_model, base_period=None, max_len=max_len)
    out = jax.block_until_ready(classic_positional_encoding_forward(x, pe))
    ref = x + pe[None, :seq_len, :]
    assert out.shape == x.shape and out.dtype == x.dtype
    err = float(jnp.max(jnp.abs(out - ref)))
    assert err <= 1e-6, f"mismatch {err} at shape {(batch, seq_len, d_model)}"


if __name__ == "__main__":
    keys = jax.random.split(jax.random.PRNGKey(0), 5)

    # Primary small demo shape of the module: batch=2, seq=8, hidden=32.
    _check(keys[0], batch=2, seq_len=8, d_model=32, max_len=64)          # tiny path

    # Exercise the other code paths at modest sizes.
    _check(keys[1], batch=2, seq_len=256, d_model=256, max_len=512)      # fast 3-D path
    _check(keys[2], batch=2, seq_len=512, d_model=80, max_len=600)       # flattened path
    _check(keys[3], batch=8, seq_len=257, d_model=36, max_len=300)       # padded fallback
    _check(keys[4], batch=2, seq_len=1024, d_model=1024, max_len=1024)   # larger fast path

    print("KERNEL_OK")
</pallas_src>

<mosaic_0001>
module attributes {stable_mosaic.version = 11 : i64} {
  func.func @_add_pe_tiny_kernel(%arg0: memref<2x8x32xf32, #tpu.memory_space<vmem>>, %arg1: memref<8x32xf32, #tpu.memory_space<vmem>>, %arg2: memref<2x8x32xf32, #tpu.memory_space<vmem>>) attributes {dimension_semantics = [], scalar_prefetch = 0 : i64, scratch_operands = 0 : i64, tpu.core_type = #tpu.core_type<tc>} {
    %c0 = arith.constant 0 : index
    %c0_0 = arith.constant 0 : index
    %c0_1 = arith.constant 0 : index
    %0 = vector.load %arg0[%c0, %c0_0, %c0_1] : memref<2x8x32xf32, #tpu.memory_space<vmem>>, vector<2x8x32xf32>
    %c0_2 = arith.constant 0 : index
    %c0_3 = arith.constant 0 : index
    %1 = vector.load %arg1[%c0_2, %c0_3] : memref<8x32xf32, #tpu.memory_space<vmem>>, vector<8x32xf32>
    %2 = vector.shape_cast %1 : vector<8x32xf32> to vector<1x8x32xf32>
    %3 = vector.broadcast %2 : vector<1x8x32xf32> to vector<2x8x32xf32>
    %4 = arith.addf %0, %3 : vector<2x8x32xf32>
    %c0_4 = arith.constant 0 : index
    %c0_5 = arith.constant 0 : index
    %c0_6 = arith.constant 0 : index
    %5 = vector.load %arg2[%c0_4, %c0_5, %c0_6] : memref<2x8x32xf32, #tpu.memory_space<vmem>>, vector<2x8x32xf32>
    tpu.vector_store %arg2[%c0_4, %c0_5, %c0_6], %4 {strides = array<i32>} : memref<2x8x32xf32, #tpu.memory_space<vmem>>, vector<2x8x32xf32>,
    return
  }
}

</mosaic_0001>

<llo_original>
// kernel: tpu_custom_call.1
$region0: #{tpu_custom_call.1}
  #allocation0 [shape = 'u32[]', space=smem, size = 0x4, offset = 0x4, fixed_abs, tag = 'smem constant byte address 0x4 - core index']
  #allocation1 [shape = 'u32[144,128]{1,0:T(1,128)}', space=vmem, size = 0x12000, scoped, tag = 'internal scratch']
  %s0 = inlined_call_operand.hbm [shape: f32[2,8,32], index: 0, kind: input, shape index: {}]
  %s1 = inlined_call_operand.hbm [shape: f32[8,32], index: 1, kind: input, shape index: {}]
  %s2 = inlined_call_operand.hbm [shape: f32[2,8,32], index: 2, kind: output, shape index: {}]
  %s3 = sld [smem:[#allocation0]]
  $region26: #{tpu_custom_call.1} parent=0
    _
  %s5 = ssub.s32 1, %s3
  %s6 = scalar_select 0, %s5, %s3
  $region1: #{tpu_custom_call.1} parent=0
    #allocation2 [shape = 'u8[8192]{0}', space=vmem, size = 0x2000, scoped, tag = 'input window, operand 0, single buffered']
    #allocation3 [shape = 's32[1]{0}', space=sflag, size = 0x4, scoped, tag = 'scoped memory for tpu_custom_call.1']
    #allocation4 [shape = 's32[1]{0}', space=sflag, size = 0x4, scoped, tag = 'scoped memory for tpu_custom_call.1']
    #allocation5 [shape = 'u8[4096]{0}', space=vmem, size = 0x1000, scoped, tag = 'input window, operand 1, single buffered']
    #allocation6 [shape = 's32[1]{0}', space=sflag, size = 0x4, scoped, tag = 'scoped memory for tpu_custom_call.1']
    #allocation7 [shape = 'u8[8192]{0}', space=vmem, size = 0x2000, scoped, tag = 'output window, operand 0, single buffered']
    %7 = vsyncpa [#allocation3], 0
    %8 = vsyncpa [#allocation6], 0
    %9 = vsyncpa [#allocation4], 0
    // Predicated region
    $region2: #{tpu_custom_call.1} parent=1 // pred_check
      _
    $region3: #{tpu_custom_call.1} parent=1 // pred_check_branch
      %11 = sbr.rel (0) target = $region5
    $region4: #{tpu_custom_call.1} parent=1 // pred_region
      %s13 = ssub.s32 256, 256
      %14 = vsyncadd [#allocation3], %s13
      %s15 = sshll.u32 [#allocation2], 4
      %s16 = int_to_ptr.vmem [resolvable:$true] %s15
      %21 = dma.hbm_to_vmem [thread:$0]  %s0, 256, %s16, [#allocation3], 128, 128, 8
    $region5: #{tpu_custom_call.1} parent=1 // pred_fallthru
      _
    // Predicated region
    $region6: #{tpu_custom_call.1} parent=1 // pred_check
      _
    $region7: #{tpu_custom_call.1} parent=1 // pred_check_branch
      %23 = sbr.rel (0) target = $region9
    $region8: #{tpu_custom_call.1} parent=1 // pred_region
      %s25 = ssub.s32 128, 128
      %26 = vsyncadd [#allocation6], %s25
      %s28 = sshll.u32 [#allocation5], 4
      %s29 = int_to_ptr.vmem [resolvable:$true] %s28
      %31 = dma.hbm_to_vmem [thread:$0]  %s1, 128, %s29, [#allocation6]
    $region9: #{tpu_custom_call.1} parent=1 // pred_fallthru
      _
    // Predicated region
    $region10: #{tpu_custom_call.1} parent=1 // pred_check
      _
    $region11: #{tpu_custom_call.1} parent=1 // pred_check_branch
      %33 = sbr.rel (0) target = $region13
    $region12: #{tpu_custom_call.1} parent=1 // pred_region
      %34 = dma.done [#allocation3], 256
    $region13: #{tpu_custom_call.1} parent=1 // pred_fallthru
      _
    // Predicated region
    $region14: #{tpu_custom_call.1} parent=1 // pred_check
      _
    $region15: #{tpu_custom_call.1} parent=1 // pred_check_branch
      %36 = sbr.rel (0) target = $region17
    $region16: #{tpu_custom_call.1} parent=1 // pred_region
      %37 = dma.done [#allocation6], 128
    $region17: #{tpu_custom_call.1} parent=1 // pred_fallthru
      _
    %v38 = vld [vmem:[#allocation2] sm:$0xff]
    %v39 = vld [vmem:[#allocation2 + $0x8] sm:$0xff]
    %v40 = vld [vmem:[#allocation5] sm:$0xff]
    %v41 = vadd.f32 %v38, %v40
    %v42 = vadd.f32 %v39, %v40
    %vm43 = vcmask 261120
    %44 = vst.msk [vmem:[#allocation7] sm:$0xff] %vm43, %v41
    %45 = vst.msk [vmem:[#allocation7 + $0x8] sm:$0xff] %vm43, %v42
    // Predicated region
    $region18: #{tpu_custom_call.1} parent=1 // pred_check
      _
    $region19: #{tpu_custom_call.1} parent=1 // pred_check_branch
      %47 = sbr.rel (0) target = $region21
    $region20: #{tpu_custom_call.1} parent=1 // pred_region
      %s49 = ssub.s32 256, 256
      %50 = vsyncadd [#allocation4], %s49
      %s51 = sshll.u32 [#allocation7], 4
      %s52 = int_to_ptr.vmem [resolvable:$true] %s51
      %57 = dma.vmem_to_hbm [thread:$0]  %s52, 256, %s2, [#allocation4], 128, 128, 8
    $region21: #{tpu_custom_call.1} parent=1 // pred_fallthru
      _
    // Predicated region
    $region22: #{tpu_custom_call.1} parent=1 // pred_check
      _
    $region23: #{tpu_custom_call.1} parent=1 // pred_check_branch
      %59 = sbr.rel (0) target = $region25
    $region24: #{tpu_custom_call.1} parent=1 // pred_region
      %60 = dma.done [#allocation4], 256
    $region25: #{tpu_custom_call.1} parent=1 // pred_fallthru
      _
    %61 = vsyncpa [#allocation3], 1
    %62 = vsyncpa [#allocation6], 1
    %63 = vsyncpa [#allocation4], 1

</llo_original>
